<compile_context>
chip_gen: v6e
topology: v6e:2x2x1
jax: 0.10.0
libtpu: 0.0.40
codegen_flags: <defaults>
</compile_context>

<pallas_src>
import functools

import jax
import jax.numpy as jnp
from jax.experimental import pallas as pl
from jax.experimental.pallas import tpu as pltpu


def _classifier_kernel(x_ref, wt_ref, b_ref, o_ref):
    # x_ref  : [TB, H]  VMEM tile of pooled_output
    # wt_ref : [H,  L]  pre-transposed weight (resident, constant index_map)
    # b_ref  : [1,  L]  bias (resident)
    # o_ref  : [TB, L]
    acc = jnp.dot(x_ref[...], wt_ref[...], preferred_element_type=jnp.float32)
    o_ref[...] = (acc + b_ref[...].astype(jnp.float32)).astype(o_ref.dtype)


def _round_down(x, m):
    return max(m, (x // m) * m)


def _round_up(x, m):
    return ((x + m - 1) // m) * m


def classification_head(pooled_output, weight, bias, *,
                        max_tile_b=4096,
                        compute_dtype=None,
                        use_pallas=None):
    """y = pooled_output @ weight.T + bias   (dropout = identity in eval mode)

    pooled_output: [B, H]
    weight:        [L, H]   (PyTorch nn.Linear layout)
    bias:          [L]
    use_pallas:    None -> auto (plain XLA for tiny batches), True forces the
                   Pallas kernel, False forces the XLA fallback.
    returns:       [B, L]   (dtype of pooled_output)
    """
    B, H = pooled_output.shape
    L, H_w = weight.shape
    assert H == H_w, "hidden-size mismatch between pooled_output and weight"

    out_dtype = pooled_output.dtype
    if compute_dtype is None:
        compute_dtype = pooled_output.dtype
    itemsize = jnp.dtype(compute_dtype).itemsize

    # Pin everything to one compute dtype (avoids silent promotion / upcasts).
    x = pooled_output.astype(compute_dtype)
    w_t = jnp.transpose(weight).astype(compute_dtype)   # [H, L], done once
    b2 = bias.reshape(1, L).astype(compute_dtype)

    # --- small-batch fallback: a single-step pallas_call is pure launch /
    # DMA-setup overhead versus a fused XLA op.
    small = (B * H * itemsize) < (256 * 1024)
    if use_pallas is None:
        use_pallas = not small
    if not use_pallas:
        ref = jnp.dot(x, w_t, preferred_element_type=jnp.float32)
        return (ref + b2.astype(jnp.float32)).astype(out_dtype)

    # --- batch tile size from a VMEM budget -------------------------------
    # Sublane packing multiple for the compute dtype (f32:8, bf16:16, int8:32).
    sub = {4: 8, 2: 16, 1: 32}.get(itemsize, 8)
    # Budget ~12 MiB for the double-buffered x tiles: safe inside v5e's 16 MiB
    # scoped default and v7x's 64 MiB physical VMEM, near-roofline tile size.
    x_budget_bytes = 12 * 1024 * 1024
    tb_budget = max(sub, ((x_budget_bytes // (2 * H * itemsize)) // sub) * sub)
    TB = min(tb_budget, _round_down(max_tile_b, sub))

    if B <= TB:
        if B >= 2 * sub:
            # Ensure >=2 grid steps so the "parallel" batch axis can be split
            # across both TensorCores on v7x.
            TB = _round_up((B + 1) // 2, sub)
        else:
            TB = B  # full-batch block (equals the full array dim -> legal)
    grid = (pl.cdiv(B, TB),)

    cost = pl.CostEstimate(
        flops=2 * B * H * L,
        transcendentals=0,
        bytes_accessed=itemsize * (B * H + H * L + L)
        + jnp.dtype(out_dtype).itemsize * B * L,
    )

    out = pl.pallas_call(
        _classifier_kernel,
        out_shape=jax.ShapeDtypeStruct((B, L), out_dtype),
        grid_spec=pltpu.PrefetchScalarGridSpec(
            num_scalar_prefetch=0,
            grid=grid,
            in_specs=[
                # x: tiled over the batch axis, pipelined / double-buffered.
                pl.BlockSpec((TB, H), lambda i: (i, 0)),
                # weight [H, L]: constant index_map -> stays resident in VMEM.
                pl.BlockSpec((H, L), lambda i: (0, 0)),
                # bias: constant index_map -> resident.
                pl.BlockSpec((1, L), lambda i: (0, 0)),
            ],
            out_specs=pl.BlockSpec((TB, L), lambda i: (i, 0)),
        ),
        compiler_params=pltpu.CompilerParams(
            # Batch tiles are independent -> shard across TCs on v7x.
            dimension_semantics=("parallel",),
            vmem_limit_bytes=32 * 1024 * 1024,
        ),
        cost_estimate=cost,
    )(x, w_t, b2)
    return out


def _reference(pooled_output, weight, bias):
    acc = jnp.dot(pooled_output.astype(jnp.float32), weight.T.astype(jnp.float32))
    return (acc + bias.astype(jnp.float32)).astype(pooled_output.dtype)


if __name__ == "__main__":
    key = jax.random.PRNGKey(0)
    k_x, k_w, k_b, k_x2 = jax.random.split(key, 4)

    # --- small shapes consistent with the module --------------------------
    batch = 2
    hidden_size = 32
    num_labels = 8

    pooled_output = jax.random.normal(
        k_x, (batch, hidden_size), dtype=jnp.float32)
    bound = 1.0 / (hidden_size ** 0.5)
    weight = jax.random.uniform(
        k_w, (num_labels, hidden_size),
        minval=-bound, maxval=bound, dtype=jnp.float32)
    bias = jax.random.uniform(
        k_b, (num_labels,),
        minval=-bound, maxval=bound, dtype=jnp.float32)

    # 1) Force the Pallas kernel at the tiny shape (single-step grid).
    out_pallas = classification_head(pooled_output, weight, bias,
                                     use_pallas=True)
    out_pallas = jax.block_until_ready(out_pallas)
    ref = _reference(pooled_output, weight, bias)
    assert out_pallas.shape == (batch, num_labels)
    assert jnp.allclose(out_pallas, ref, atol=1e-5, rtol=1e-5)

    # 2) Auto path (small batch -> plain-XLA fallback) must match too.
    out_auto = jax.block_until_ready(
        classification_head(pooled_output, weight, bias))
    assert jnp.allclose(out_auto, ref, atol=1e-5, rtol=1e-5)

    # 3) Slightly larger batch to exercise the multi-step (>=2 tiles,
    #    megacore-splittable, ragged last tile) Pallas path.
    batch2 = 40
    pooled_output2 = jax.random.normal(
        k_x2, (batch2, hidden_size), dtype=jnp.float32)
    out2 = jax.block_until_ready(
        classification_head(pooled_output2, weight, bias, use_pallas=True))
    ref2 = _reference(pooled_output2, weight, bias)
    assert out2.shape == (batch2, num_labels)
    assert jnp.allclose(out2, ref2, atol=1e-5, rtol=1e-5)

    print("KERNEL_OK")
</pallas_src>

<mosaic_0001>
module attributes {stable_mosaic.version = 11 : i64} {
  func.func @_classifier_kernel(%arg0: i32, %arg1: memref<2x32xf32, #tpu.memory_space<vmem>>, %arg2: memref<32x8xf32, #tpu.memory_space<vmem>>, %arg3: memref<1x8xf32, #tpu.memory_space<vmem>>, %arg4: memref<2x8xf32, #tpu.memory_space<vmem>>) attributes {dimension_semantics = [#tpu.dimension_semantics<parallel>], iteration_bounds = array<i64: 1>, scalar_prefetch = 0 : i64, scratch_operands = 0 : i64, tpu.core_type = #tpu.core_type<tc>, window_params = [{transform_indices = @transform_0, window_bounds = array<i64: 2, 32>}, {pipeline_mode = #tpu.pipeline_mode<synchronous>, transform_indices = @transform_1, window_bounds = array<i64: 32, 8>}, {pipeline_mode = #tpu.pipeline_mode<synchronous>, transform_indices = @transform_2, window_bounds = array<i64: 1, 8>}, {transform_indices = @transform_3, window_bounds = array<i64: 2, 8>}]} {
    %c0 = arith.constant 0 : index
    %c0_0 = arith.constant 0 : index
    %0 = vector.load %arg1[%c0, %c0_0] : memref<2x32xf32, #tpu.memory_space<vmem>>, vector<2x32xf32>
    %c0_1 = arith.constant 0 : index
    %c0_2 = arith.constant 0 : index
    %1 = vector.load %arg2[%c0_1, %c0_2] : memref<32x8xf32, #tpu.memory_space<vmem>>, vector<32x8xf32>
    %cst = arith.constant dense<0.000000e+00> : vector<2x8xf32>
    %2 = tpu.matmul %0, %1, %cst {dimension_numbers = #tpu.dot_dimension_numbers<[1], [0], [0], [1], [0, 0, 1, 1], [], []>} : vector<2x32xf32>, vector<32x8xf32>, vector<2x8xf32> -> vector<2x8xf32>
    %c0_3 = arith.constant 0 : index
    %c0_4 = arith.constant 0 : index
    %3 = vector.load %arg3[%c0_3, %c0_4] : memref<1x8xf32, #tpu.memory_space<vmem>>, vector<1x8xf32>
    %4 = vector.broadcast %3 : vector<1x8xf32> to vector<2x8xf32>
    %5 = arith.addf %2, %4 : vector<2x8xf32>
    %c0_5 = arith.constant 0 : index
    %c0_6 = arith.constant 0 : index
    %6 = vector.load %arg4[%c0_5, %c0_6] : memref<2x8xf32, #tpu.memory_space<vmem>>, vector<2x8xf32>
    tpu.vector_store %arg4[%c0_5, %c0_6], %5 {strides = array<i32>} : memref<2x8xf32, #tpu.memory_space<vmem>>, vector<2x8xf32>,
    return
  }
  func.func @transform_0(%arg0: i32) -> (i32, i32) {
    %c0_i32 = arith.constant 0 : i32
    %c0_i32_0 = arith.constant 0 : i32
    return %arg0, %c0_i32 : i32, i32
  }
  func.func @transform_1(%arg0: i32) -> (i32, i32) {
    %c0_i32 = arith.constant 0 : i32
    %c0_i32_0 = arith.constant 0 : i32
    %c0_i32_1 = arith.constant 0 : i32
    return %c0_i32, %c0_i32_0 : i32, i32
  }
  func.func @transform_2(%arg0: i32) -> (i32, i32) {
    %c0_i32 = arith.constant 0 : i32
    %c0_i32_0 = arith.constant 0 : i32
    %c0_i32_1 = arith.constant 0 : i32
    return %c0_i32, %c0_i32_0 : i32, i32
  }
  func.func @transform_3(%arg0: i32) -> (i32, i32) {
    %c0_i32 = arith.constant 0 : i32
    %c0_i32_0 = arith.constant 0 : i32
    return %arg0, %c0_i32 : i32, i32
  }
}

</mosaic_0001>

<llo_original>
// kernel: tpu_custom_call.1
$region0: #{tpu_custom_call.1}
  #allocation0 [shape = 'u32[]', space=smem, size = 0x4, offset = 0x4, fixed_abs, tag = 'smem constant byte address 0x4 - core index']
  #allocation1 [shape = 'u32[144,128]{1,0:T(1,128)}', space=vmem, size = 0x12000, scoped, tag = 'internal scratch']
  %s0 = inlined_call_operand.vmem [shape: f32[2,32], index: 0, kind: input, shape index: {}]
  %s1 = inlined_call_operand.vmem [shape: f32[32,8], index: 1, kind: input, shape index: {}]
  %s2 = inlined_call_operand.vmem [shape: f32[1,8], index: 2, kind: input, shape index: {}]
  %s3 = inlined_call_operand.hbm [shape: f32[2,8], index: 3, kind: output, shape index: {}]
  %s4 = sld [smem:[#allocation0]]
  $region22: #{tpu_custom_call.1} parent=0
    _
  %s6 = ssub.s32 1, %s4
  %s7 = scalar_select 0, %s6, %s4
  $region1: #{tpu_custom_call.1} parent=0
    #allocation2 [shape = 'u8[1024]{0}', space=vmem, size = 0x400, scoped, tag = 'output window, operand 0, single buffered']
    #allocation3 [shape = 's32[1]{0}', space=sflag, size = 0x4, scoped, tag = 'scoped memory for tpu_custom_call.1']
    %8 = vsyncpa [#allocation3], 0
    // Predicated region
    $region2: #{tpu_custom_call.1} parent=1 // pred_check
      _
    $region3: #{tpu_custom_call.1} parent=1 // pred_check_branch
      %10 = sbr.rel (0) target = $region5
    $region4: #{tpu_custom_call.1} parent=1 // pred_region
      _
    $region5: #{tpu_custom_call.1} parent=1 // pred_fallthru
      _
    // Predicated region
    $region6: #{tpu_custom_call.1} parent=1 // pred_check
      _
    $region7: #{tpu_custom_call.1} parent=1 // pred_check_branch
      %12 = sbr.rel (0) target = $region9
    $region8: #{tpu_custom_call.1} parent=1 // pred_region
      _
    $region9: #{tpu_custom_call.1} parent=1 // pred_fallthru
      _
    // Predicated region
    $region10: #{tpu_custom_call.1} parent=1 // pred_check
      _
    $region11: #{tpu_custom_call.1} parent=1 // pred_check_branch
      %14 = sbr.rel (0) target = $region13
    $region12: #{tpu_custom_call.1} parent=1 // pred_region
      _
    $region13: #{tpu_custom_call.1} parent=1 // pred_fallthru
      _
    %v15 = vld [vmem:[%s0] sm:$0x3]
    %v16 = vld [vmem:[%s1] sm:$0xff]
    %v17 = vld [vmem:[%s1 + $0x8] sm:$0xff]
    %v18 = vld [vmem:[%s1 + $0x10] sm:$0xff]
    %v19 = vld [vmem:[%s1 + $0x18] sm:$0xff]
    %v20 = vld [vmem:[%s2] sm:$0x1]
    %v22 = vlaneseq
    %v23 = vshrl.u32 %v22, 7
    %v24 = vsub.s32 0, %v23
    %v25 = vrot.slane %v20, %v24
    %vm27 = vcmask 261120
    %v29 = vsel %vm27, %v15, 0
    %31 = vmatprep.subr.mxu0 0.0
    %32 = vmatpush1.msra.mxu0 0.0
    %33 = vmatprep.subr.mxu0 0.0
    %34 = vmatpush1.msra.mxu0 0.0
    %35 = vmatprep.subr.mxu0 0.0
    %36 = vmatpush1.msra.mxu0 0.0
    %37 = vmatprep.subr.mxu0 0.0
    %38 = vmatpush1.msra.mxu0 0.0
    %39 = vmatprep.subr.mxu0 0.0
    %40 = vmatpush1.msra.mxu0 0.0
    %41 = vmatprep.subr.mxu0 0.0
    %42 = vmatpush1.msra.mxu0 0.0
    %43 = vmatprep.subr.mxu0 0.0
    %44 = vmatpush1.msra.mxu0 0.0
    %45 = vmatprep.subr.mxu0 0.0
    %46 = vmatpush1.msra.mxu0 0.0
    %47 = vmatprep.subr.mxu0 0.0
    %48 = vmatpush1.msra.mxu0 0.0
    %49 = vmatprep.subr.mxu0 0.0
    %50 = vmatpush1.msra.mxu0 0.0
    %51 = vmatprep.subr.mxu0 0.0
    %52 = vmatpush1.msra.mxu0 0.0
    %53 = vmatprep.subr.mxu0 0.0
    %54 = vmatpush1.msra.mxu0 0.0
    %55 = vmatprep.subr.mxu0 0.0
    %56 = vmatpush1.msra.mxu0 %v19
    %57 = vmatprep.subr.mxu0 0.0
    %58 = vmatpush1.msra.mxu0 %v18
    %59 = vmatprep.subr.mxu0 0.0
    %60 = vmatpush1.msra.mxu0 %v17
    %61 = vmatprep.subr.mxu0 0.0
    %62 = vmatpush1.msra.mxu0 %v16
    %63 = vmatprep.subr.mxu0 0.0
    %64 = vmatpush2.msra.mxu0 0.0
    %65 = vmatprep.subr.mxu0 0.0
    %66 = vmatpush2.msra.mxu0 0.0
    %67 = vmatprep.subr.mxu0 0.0
    %68 = vmatpush2.msra.mxu0 0.0
    %69 = vmatprep.subr.mxu0 0.0
    %70 = vmatpush2.msra.mxu0 0.0
    %71 = vmatprep.subr.mxu0 0.0
    %72 = vmatpush2.msra.mxu0 0.0
    %73 = vmatprep.subr.mxu0 0.0
    %74 = vmatpush2.msra.mxu0 0.0
    %75 = vmatprep.subr.mxu0 0.0
    %76 = vmatpush2.msra.mxu0 0.0
    %77 = vmatprep.subr.mxu0 0.0
    %78 = vmatpush2.msra.mxu0 0.0
    %79 = vmatprep.subr.mxu0 0.0
    %80 = vmatpush2.msra.mxu0 0.0
    %81 = vmatprep.subr.mxu0 0.0
    %82 = vmatpush2.msra.mxu0 0.0
    %83 = vmatprep.subr.mxu0 0.0
    %84 = vmatpush2.msra.mxu0 0.0
    %85 = vmatprep.subr.mxu0 0.0
    %86 = vmatpush2.msra.mxu0 0.0
    %87 = vmatprep.subr.mxu0 0.0
    %88 = vmatpush2.msra.mxu0 0.0
    %89 = vmatprep.subr.mxu0 0.0
    %90 = vmatpush2.msra.mxu0 0.0
    %91 = vmatprep.subr.mxu0 0.0
    %92 = vmatpush2.msra.mxu0 0.0
    %93 = vmatprep.subr.mxu0 0.0
    %94 = vmatpush2.msra.mxu0 0.0
    %95 = vmatprep.mubr.f32.mxu0 0.0
    %96 = vmatmul.mubr.f32.gmra.mxu0 %v29
    %v97 = vpop.f32.mrf.mxu0
    %v98 = vadd.f32 %v25, %v97
    %v99 = vpop.f32.mrf.mxu0
    %100 = vdwg.mxu0
    %vm101 = vcmask 58368
    %102 = vst.msk [vmem:[#allocation2] sm:$0x3] %vm101, %v98
    // Predicated region
    $region14: #{tpu_custom_call.1} parent=1 // pred_check
      _
    $region15: #{tpu_custom_call.1} parent=1 // pred_check_branch
      %104 = sbr.rel (0) target = $region17
    $region16: #{tpu_custom_call.1} parent=1 // pred_region
      %s106 = ssub.s32 32, 32
      %107 = vsyncadd [#allocation3], %s106
      %s109 = sshll.u32 [#allocation2], 4
      %s110 = int_to_ptr.vmem [resolvable:$true] %s109
      %112 = dma.vmem_to_hbm [thread:$0]  %s110, 32, %s3, [#allocation3]
    $region17: #{tpu_custom_call.1} parent=1 // pred_fallthru
      _
    // Predicated region
    $region18: #{tpu_custom_call.1} parent=1 // pred_check
      _
    $region19: #{tpu_custom_call.1} parent=1 // pred_check_branch
      %114 = sbr.rel (0) target = $region21
    $region20: #{tpu_custom_call.1} parent=1 // pred_region
      %115 = dma.done [#allocation3], 32
    $region21: #{tpu_custom_call.1} parent=1 // pred_fallthru
      _
    %116 = vsyncpa [#allocation3], 1

</llo_original>
